<compile_context>
chip_gen: v7x
topology: tpu7x:2x2x1
jax: 0.10.0
libtpu: 0.0.40
codegen_flags: <defaults>
</compile_context>

<pallas_src>
import jax
import jax.numpy as jnp
from jax.experimental import pallas as pl
from jax.experimental.pallas import tpu as pltpu

BASE_VTH = 0.75     # module default base_vth
VTH_SCALE = 0.5     # module default vth_scale


def _adplif_fused_kernel(tau_ref, vth_ref, u0_ref, x_ref, o_ref, u_ref, par_ref):
    """One (row_tile, t) grid step.

    `u_ref` is the u_final output block; its block index depends only on the
    row-tile axis, so Pallas keeps it resident in VMEM across the whole time
    axis — it doubles as the recurrent membrane state.
    """
    t = pl.program_id(1)

    @pl.when(t == 0)
    def _init():
        # Hoisted scalar transcendentals: once per row tile, not per (tile, t).
        par_ref[0] = jax.nn.sigmoid(tau_ref[0])
        par_ref[1] = BASE_VTH + VTH_SCALE * jax.nn.sigmoid(vth_ref[0])
        # Seed the resident state block with the initial membrane potential.
        u_ref[...] = u0_ref[...]

    tau_s = par_ref[0]
    vth_eff = par_ref[1]

    psp = u_ref[...] + x_ref[...]
    spike = psp > vth_eff
    o_ref[...] = spike.astype(o_ref.dtype)
    # tau_s * (1 - o) * psp == where(spike, 0, tau_s * psp): drops one VPU mul
    # and the bool->f32 cast on the state path.
    u_ref[...] = jnp.where(spike, 0.0, tau_s * psp).astype(u_ref.dtype)


def _pick_block_rows(rows, cols, itemsize, target_block_bytes=2 << 20):
    """Largest row tile that (a) divides `rows`, (b) respects the (8,128) rule,
    and (c) keeps one (block_rows, cols) operand tile under the VMEM budget."""
    if rows * cols * itemsize <= target_block_bytes:
        return rows  # whole slab as a single block
    cap = max(8, (target_block_bytes // (cols * itemsize)) // 8 * 8)
    best = None
    r = 8
    while r <= min(cap, rows):
        if rows % r == 0:
            best = r
        r += 8
    if best is None:
        best = 8 if rows % 8 == 0 else rows
    return best


def adplif_forward(xs, u0, tau, vth, *, block_rows=None):
    """Fused AdPLIF forward over all T time steps.

    xs : (T, R, Cols) input slab sequence (R = B*C, Cols = H*W)
    u0 : (R, Cols)    initial membrane potential (zeros <=> PyTorch U is None)
    tau, vth : (1,)   learnable scalar parameters (pre-sigmoid)

    Returns (o: (T, R, Cols) spikes, u_final: (R, Cols) final membrane state).
    """
    T, rows, cols = xs.shape
    assert u0.shape == (rows, cols) and u0.dtype == xs.dtype
    assert cols % 128 == 0, "flattened spatial axis must be a multiple of 128"
    if block_rows is None:
        block_rows = _pick_block_rows(rows, cols, xs.dtype.itemsize)
    assert rows % block_rows == 0
    assert block_rows % 8 == 0 or block_rows == rows

    # TODO(synk): channel_wise=True variant (vth of shape (1, C, 1, 1)) is not
    # supported by this scalar-vth path.

    smem_spec = pl.BlockSpec(memory_space=pltpu.MemorySpace.SMEM)
    # State blocks: index depends only on the row tile -> resident across t.
    state_spec = pl.BlockSpec((block_rows, cols), lambda i, t: (i, 0))
    # Per-step slabs: squeeze the time axis (block size 1 along T).
    seq_spec = pl.BlockSpec((None, block_rows, cols), lambda i, t: (t, i, 0))

    o, u_final = pl.pallas_call(
        _adplif_fused_kernel,
        out_shape=(
            jax.ShapeDtypeStruct((T, rows, cols), xs.dtype),   # spikes
            jax.ShapeDtypeStruct((rows, cols), xs.dtype),      # final U
        ),
        grid=(rows // block_rows, T),
        in_specs=[smem_spec, smem_spec, state_spec, seq_spec],
        out_specs=(seq_spec, state_spec),
        scratch_shapes=[pltpu.SMEM((2,), jnp.float32)],   # [sigmoid(tau), vth_eff]
        input_output_aliases={2: 1},                      # u0 -> u_final (in place)
        compiler_params=pltpu.CompilerParams(
            dimension_semantics=("parallel", "arbitrary"),
            # Safe on v5e/v6e/v7x; raise further on v5e/v6e for >2 MiB tiles.
            vmem_limit_bytes=32 << 20,
        ),
    )(tau, vth, u0, xs)
    return o, u_final


def adplif_reference(u, x, tau, vth):
    """Pure-JAX reference mirroring the PyTorch _forward / _update (one step)."""
    tau_s = jax.nn.sigmoid(tau[0])
    vth_eff = BASE_VTH + VTH_SCALE * jax.nn.sigmoid(vth[0])
    psp = u + x
    o = (psp > vth_eff).astype(psp.dtype)
    u_new = tau_s * (1.0 - o) * psp
    return o, u_new


if __name__ == "__main__":
    # Small shapes consistent with the module's NCHW usage.
    B, C, H, W, T = 2, 4, 16, 16, 8
    key = jax.random.PRNGKey(0)
    xs = jax.random.normal(key, (T, B, C, H, W), dtype=jnp.float32)

    # Deterministic parameter init, exactly as in __init__ (both zeros).
    tau = jnp.zeros((1,), jnp.float32)
    vth = jnp.zeros((1,), jnp.float32)

    # U is None initially -> PSP = input, equivalent to U = 0.
    xs2d = xs.reshape(T, B * C, H * W)
    u0 = jnp.zeros((B * C, H * W), jnp.float32)

    fused = jax.jit(adplif_forward)
    o2d, u_final = fused(xs2d, u0, tau, vth)
    jax.block_until_ready((o2d, u_final))

    # Pure-JAX reference (per-step recurrence).
    u_r = u0
    o_ref_steps = []
    for t in range(T):
        o_r, u_r = adplif_reference(u_r, xs2d[t], tau, vth)
        o_ref_steps.append(o_r)
    o_ref = jnp.stack(o_ref_steps)

    o_seq = o2d.reshape(T, B, C, H, W)
    assert o_seq.shape == (T, B, C, H, W)
    assert jnp.allclose(o2d, o_ref), "Pallas spike output mismatch vs reference"
    assert jnp.allclose(u_final, u_r), "Pallas state mismatch vs reference"

    print("KERNEL_OK")
</pallas_src>

<mosaic_0001>
module attributes {stable_mosaic.version = 11 : i64} {
  func.func @_adplif_fused_kernel(%arg0: i32, %arg1: i32, %arg2: memref<1xf32, #tpu.memory_space<smem>>, %arg3: memref<1xf32, #tpu.memory_space<smem>>, %arg4: memref<8x256xf32, #tpu.memory_space<vmem>>, %arg5: memref<1x8x256xf32, #tpu.memory_space<vmem>>, %arg6: memref<1x8x256xf32, #tpu.memory_space<vmem>>, %arg7: memref<8x256xf32, #tpu.memory_space<vmem>>, %arg8: memref<2xf32, #tpu.memory_space<smem>>) attributes {dimension_semantics = [#tpu.dimension_semantics<parallel>, #tpu.dimension_semantics<arbitrary>], iteration_bounds = array<i64: 1, 8>, scalar_prefetch = 0 : i64, scratch_operands = 1 : i64, tpu.core_type = #tpu.core_type<tc>, window_params = [{transform_indices = @transform_0, window_bounds = array<i64: 1>}, {transform_indices = @transform_1, window_bounds = array<i64: 1>}, {transform_indices = @transform_2, window_bounds = array<i64: 8, 256>}, {transform_indices = @transform_3, window_bounds = array<i64: 1, 8, 256>}, {transform_indices = @transform_4, window_bounds = array<i64: 1, 8, 256>}, {transform_indices = @transform_5, window_bounds = array<i64: 8, 256>}]} {
    %c0_i32 = arith.constant 0 : i32
    %0 = arith.cmpi eq, %arg1, %c0_i32 : i32
    %1 = arith.extui %0 : i1 to i32
    %c0_i32_0 = arith.constant 0 : i32
    %2 = arith.cmpi ne, %1, %c0_i32_0 : i32
    scf.if %2 {
      %c0_11 = arith.constant 0 : index
      %21 = memref.load %arg2[%c0_11] : memref<1xf32, #tpu.memory_space<smem>>
      %22 = arith.negf %21 : f32
      %23 = math.exp %22 : f32
      %cst_12 = arith.constant 1.000000e+00 : f32
      %24 = arith.addf %cst_12, %23 : f32
      %25 = arith.divf %cst_12, %24 : f32
      %c0_13 = arith.constant 0 : index
      %26 = memref.load %arg8[%c0_13] : memref<2xf32, #tpu.memory_space<smem>>
      memref.store %25, %arg8[%c0_13] : memref<2xf32, #tpu.memory_space<smem>>
      %c0_14 = arith.constant 0 : index
      %27 = memref.load %arg3[%c0_14] : memref<1xf32, #tpu.memory_space<smem>>
      %28 = arith.negf %27 : f32
      %29 = math.exp %28 : f32
      %cst_15 = arith.constant 1.000000e+00 : f32
      %30 = arith.addf %cst_15, %29 : f32
      %31 = arith.divf %cst_15, %30 : f32
      %cst_16 = arith.constant 5.000000e-01 : f32
      %32 = arith.mulf %cst_16, %31 : f32
      %cst_17 = arith.constant 7.500000e-01 : f32
      %33 = arith.addf %cst_17, %32 : f32
      %c1_18 = arith.constant 1 : index
      %34 = memref.load %arg8[%c1_18] : memref<2xf32, #tpu.memory_space<smem>>
      memref.store %33, %arg8[%c1_18] : memref<2xf32, #tpu.memory_space<smem>>
      %c0_19 = arith.constant 0 : index
      %c0_20 = arith.constant 0 : index
      %35 = vector.load %arg4[%c0_19, %c0_20] : memref<8x256xf32, #tpu.memory_space<vmem>>, vector<8x256xf32>
      %c0_21 = arith.constant 0 : index
      %c0_22 = arith.constant 0 : index
      %36 = vector.load %arg7[%c0_21, %c0_22] : memref<8x256xf32, #tpu.memory_space<vmem>>, vector<8x256xf32>
      tpu.vector_store %arg7[%c0_21, %c0_22], %35 {strides = array<i32>} : memref<8x256xf32, #tpu.memory_space<vmem>>, vector<8x256xf32>,
    } else {
    }
    %c0 = arith.constant 0 : index
    %3 = memref.load %arg8[%c0] : memref<2xf32, #tpu.memory_space<smem>>
    %c1 = arith.constant 1 : index
    %4 = memref.load %arg8[%c1] : memref<2xf32, #tpu.memory_space<smem>>
    %c0_1 = arith.constant 0 : index
    %c0_2 = arith.constant 0 : index
    %5 = vector.load %arg7[%c0_1, %c0_2] : memref<8x256xf32, #tpu.memory_space<vmem>>, vector<8x256xf32>
    %c0_3 = arith.constant 0 : index
    %c0_4 = arith.constant 0 : index
    %c0_5 = arith.constant 0 : index
    %6 = vector.load %arg5[%c0_3, %c0_4, %c0_5] : memref<1x8x256xf32, #tpu.memory_space<vmem>>, vector<1x8x256xf32>
    %7 = vector.shape_cast %6 : vector<1x8x256xf32> to vector<8x256xf32>
    %8 = arith.addf %5, %7 : vector<8x256xf32>
    %9 = vector.broadcast %4 : f32 to vector<8x256xf32>
    %10 = arith.cmpf ogt, %8, %9 : vector<8x256xf32>
    %11 = arith.extui %10 : vector<8x256xi1> to vector<8x256xi32>
    %12 = arith.sitofp %11 : vector<8x256xi32> to vector<8x256xf32>
    %c0_6 = arith.constant 0 : index
    %c0_7 = arith.constant 0 : index
    %c0_8 = arith.constant 0 : index
    %13 = vector.load %arg6[%c0_6, %c0_7, %c0_8] : memref<1x8x256xf32, #tpu.memory_space<vmem>>, vector<1x8x256xf32>
    %14 = vector.shape_cast %13 : vector<1x8x256xf32> to vector<8x256xf32>
    %15 = vector.shape_cast %12 : vector<8x256xf32> to vector<1x8x256xf32>
    tpu.vector_store %arg6[%c0_6, %c0_7, %c0_8], %15 {strides = array<i32>} : memref<1x8x256xf32, #tpu.memory_space<vmem>>, vector<1x8x256xf32>,
    %16 = vector.broadcast %3 : f32 to vector<8x256xf32>
    %17 = arith.mulf %16, %8 : vector<8x256xf32>
    %cst = arith.constant 0.000000e+00 : f32
    %18 = vector.broadcast %cst : f32 to vector<8x256xf32>
    %19 = arith.select %10, %18, %17 : vector<8x256xi1>, vector<8x256xf32>
    %c0_9 = arith.constant 0 : index
    %c0_10 = arith.constant 0 : index
    %20 = vector.load %arg7[%c0_9, %c0_10] : memref<8x256xf32, #tpu.memory_space<vmem>>, vector<8x256xf32>
    tpu.vector_store %arg7[%c0_9, %c0_10], %19 {strides = array<i32>} : memref<8x256xf32, #tpu.memory_space<vmem>>, vector<8x256xf32>,
    return
  }
  func.func @transform_0(%arg0: i32, %arg1: i32) -> i32 {
    %c0_i32 = arith.constant 0 : i32
    %c0_i32_0 = arith.constant 0 : i32
    return %c0_i32 : i32
  }
  func.func @transform_1(%arg0: i32, %arg1: i32) -> i32 {
    %c0_i32 = arith.constant 0 : i32
    %c0_i32_0 = arith.constant 0 : i32
    return %c0_i32 : i32
  }
  func.func @transform_2(%arg0: i32, %arg1: i32) -> (i32, i32) {
    %c0_i32 = arith.constant 0 : i32
    %c0_i32_0 = arith.constant 0 : i32
    return %arg0, %c0_i32 : i32, i32
  }
  func.func @transform_3(%arg0: i32, %arg1: i32) -> (i32, i32, i32) {
    %c0_i32 = arith.constant 0 : i32
    %c0_i32_0 = arith.constant 0 : i32
    return %arg1, %arg0, %c0_i32 : i32, i32, i32
  }
  func.func @transform_4(%arg0: i32, %arg1: i32) -> (i32, i32, i32) {
    %c0_i32 = arith.constant 0 : i32
    %c0_i32_0 = arith.constant 0 : i32
    return %arg1, %arg0, %c0_i32 : i32, i32, i32
  }
  func.func @transform_5(%arg0: i32, %arg1: i32) -> (i32, i32) {
    %c0_i32 = arith.constant 0 : i32
    %c0_i32_0 = arith.constant 0 : i32
    return %arg0, %c0_i32 : i32, i32
  }
}

</mosaic_0001>

<llo_original>
// kernel: adplif_forward.1
$region0: #{adplif_forward.1}
  #allocation0 [shape = 'u32[]', space=smem, size = 0x4, offset = 0x4, fixed_abs, tag = 'smem constant byte address 0x4 - core index']
  #allocation1 [shape = 'u32[144,128]{1,0:T(1,128)}', space=vmem, size = 0x12000, scoped, tag = 'internal scratch']
  #allocation2 [shape = 'f32[2]{0:T(128)}', space=smem, size = 0x200, scoped, tag = 'scratch operand']
  #allocation3 [shape = 'f32[1]{0:T(128)S(6)}', space=smem, size = 0x200, scoped, tag = 'scoped memory for adplif_forward.1']
  #allocation4 [shape = 'f32[1]{0:T(128)S(6)}', space=smem, size = 0x200, scoped, tag = 'scoped memory for adplif_forward.1']
  %s0 = inlined_call_operand.<no memory space> [shape: f32[1], index: 0, kind: input, shape index: {}]
  %s1 = inlined_call_operand.<no memory space> [shape: f32[1], index: 1, kind: input, shape index: {}]
  %s2 = inlined_call_operand.hbm [shape: f32[8,256], index: 2, kind: input, shape index: {}, may-alias: {2,5}]
  %s3 = inlined_call_operand.hbm [shape: f32[8,8,256], index: 3, kind: input, shape index: {}]
  %s4 = inlined_call_operand.hbm [shape: f32[8,8,256], index: 4, kind: output, shape index: {0}]
  %s5 = inlined_call_operand.hbm [shape: f32[8,256], index: 5, kind: output, shape index: {1}, may-alias: {2,5}]
  %6 = xla_tuple %s4, %s5
  %s7 = sld [smem:[#allocation0]]
  $region69: #{adplif_forward.1} parent=0
    _
  %s9 = ssub.s32 1, %s7
  %s10 = scalar_select 0, %s9, %s7
  %11 = sst [smem:[#allocation3]] %s0
  %12 = sst [smem:[#allocation4]] %s1
  $region1: #{adplif_forward.1} parent=0
    #allocation5 [shape = 'u8[8192]{0}', space=vmem, size = 0x2000, scoped, tag = 'input window, operand 2, single buffered']
    #allocation6 [shape = 's32[2]{0}', space=sflag, size = 0x8, scoped, tag = 'scoped memory for adplif_forward.1']
    #allocation7 [shape = 's32[2]{0}', space=sflag, size = 0x8, scoped, tag = 'scoped memory for adplif_forward.1']
    #allocation8 [shape = 'u8[16384]{0}', space=vmem, size = 0x4000, scoped, tag = 'input window, operand 3']
    #allocation9 [shape = 's32[2]{0}', space=sflag, size = 0x8, scoped, tag = 'scoped memory for adplif_forward.1']
    #allocation10 [shape = 'u8[16384]{0}', space=vmem, size = 0x4000, scoped, tag = 'output window, operand 0']
    #allocation11 [shape = 'u8[8192]{0}', space=vmem, size = 0x2000, scoped, tag = 'output window, operand 1, single buffered']
    #allocation12 [shape = 's32[1]{0}', space=sflag, size = 0x4, scoped, tag = 'scoped memory for adplif_forward.1']
    %13 = vsyncpa [#allocation6], 0
    %14 = vsyncpa [#allocation9], 0
    %s15 = scalar_lea.sflag [#allocation9], 1
    %16 = vsyncpa %s15, 0
    %17 = vsyncpa [#allocation7], 0
    %s18 = scalar_lea.sflag [#allocation7], 1
    %19 = vsyncpa %s18, 0
    %20 = vsyncpa [#allocation12], 0
    loop: start=0, step=1, limit=10
    $region2: #{adplif_forward.1} parent=1 // loop_pre_header
      _
    $region3: #{adplif_forward.1} parent=1 // loop_header
      %s22 = sphi 0, %s26
      %p23 = scmp.ge.s32.totalorder %s22, 10
      %s29 = sphi 0, %s41
      %s30 = sphi 0, %s37
      %s31 = sphi 0, %s29
      %s32 = sphi 0, %s30
      %s33 = sphi 0, %s31
      %s34 = sphi 0, %s32
      %s42 = sphi 0, %s42
      %s44 = sphi 0, %s42
      %s45 = sphi 0, %s44
      %s59 = sphi 0, %s45
      %s63 = sphi 0, %s63
      %s65 = sphi 0, %s63
      %s66 = sphi 0, %s65
      %s80 = sphi 0, %s66
      %s86 = sphi 0, %s88
      %s89 = sphi 0, %s86
      %s90 = sphi 0, %s89
      %s106 = sphi 0, %s90
      %s114 = sphi 0, %s116
      %s117 = sphi 0, %s114
      %s118 = sphi 0, %s117
      %s134 = sphi 0, %s118
      %s142 = sphi 0, %s144
      %s145 = sphi 0, %s142
      %s146 = sphi 0, %s145
      %s162 = sphi 0, %s146
      %s168 = sphi 0, %s170
      %s171 = sphi 0, %s168
      %s172 = sphi 0, %s171
      %s188 = sphi 0, %s172
    $region4: #{adplif_forward.1} parent=1 // loop_header_branch
      %25 = sbr.rel (%p23) target = $region8
    $region5: #{adplif_forward.1} parent=1 // loop_body
      %s27 = ssub.s32 %s22, 1
      %s28 = ssub.s32 %s22, 2
      %s35 = sadd.s32 1, %s30
      %p36 = scmp.ge.s32.totalorder %s35, 8
      %s37 = scalar_select %p36, 0, %s35
      %s38 = sadd.s32 1, %s29
      %s39 = scalar_select %p36, %s38, %s29
      %p40 = scmp.ge.s32.totalorder %s39, 1
      %s41 = scalar_select %p40, 0, %s39
      %s43 = sadd.s32 %s42, 1
      %p46 = scmp.eq.s32.totalorder %s22, 7
      %p47 = scmp.ne.s32.totalorder %s42, %s44
      %p48 = scmp.eq.s32.totalorder %s22, 0
      %p49 = por %p47, %p48
      %p50 = scmp.ne.s32.totalorder %s42, %s44
      %p51 = scmp.eq.s32.totalorder %s27, 7
      %p52 = por %p50, %p51
      %p53 = scmp.ne.s32.totalorder %s44, %s45
      %p54 = scmp.eq.s32.totalorder %s27, 0
      %p55 = por %p53, %p54
      %p56 = scmp.ne.s32.totalorder %s44, %s45
      %p57 = scmp.eq.s32.totalorder %s28, 7
      %p58 = por %p56, %p57
      %p60 = scmp.ne.s32.totalorder %s45, %s59
      %p61 = scmp.eq.s32.totalorder %s28, 0
      %p62 = por %p60, %p61
      %s64 = sadd.s32 %s63, 1
      %p67 = scmp.eq.s32.totalorder %s22, 7
      %p68 = scmp.ne.s32.totalorder %s63, %s65
      %p69 = scmp.eq.s32.totalorder %s22, 0
      %p70 = por %p68, %p69
      %p71 = scmp.ne.s32.totalorder %s63, %s65
      %p72 = scmp.eq.s32.totalorder %s27, 7
      %p73 = por %p71, %p72
      %p74 = scmp.ne.s32.totalorder %s65, %s66
      %p75 = scmp.eq.s32.totalorder %s27, 0
      %p76 = por %p74, %p75
      %p77 = scmp.ne.s32.totalorder %s65, %s66
      %p78 = scmp.eq.s32.totalorder %s28, 7
      %p79 = por %p77, %p78
      %p81 = scmp.ne.s32.totalorder %s66, %s80
      %p82 = scmp.eq.s32.totalorder %s28, 0
      %p83 = por %p81, %p82
      %s84 = ssub.s32 %s29, %s41
      %p85 = scmp.eq.s32.totalorder %s84, 0
      %s87 = sadd.s32 %s86, 1
      %s88 = scalar_select %p85, %s86, %s87
      %p91 = pneg %p85
      %p92 = scmp.eq.s32.totalorder %s22, 7
      %p93 = por %p91, %p92
      %p94 = scmp.ne.s32.totalorder %s86, %s89
      %p95 = scmp.eq.s32.totalorder %s22, 0
      %p96 = por %p94, %p95
      %p97 = scmp.ne.s32.totalorder %s86, %s89
      %p98 = scmp.eq.s32.totalorder %s27, 7
      %p99 = por %p97, %p98
      %p100 = scmp.ne.s32.totalorder %s89, %s90
      %p101 = scmp.eq.s32.totalorder %s27, 0
      %p102 = por %p100, %p101
      %p103 = scmp.ne.s32.totalorder %s89, %s90
      %p104 = scmp.eq.s32.totalorder %s28, 7
      %p105 = por %p103, %p104
      %p107 = scmp.ne.s32.totalorder %s90, %s106
      %p108 = scmp.eq.s32.totalorder %s28, 0
      %p109 = por %p107, %p108
      %s110 = ssub.s32 %s30, %s37
      %s111 = ssub.s32 %s29, %s41
      %s112 = sor.u32 %s110, %s111
      %p113 = scmp.eq.s32.totalorder %s112, 0
      %s115 = sadd.s32 %s114, 1
      %s116 = scalar_select %p113, %s114, %s115
      %p119 = pneg %p113
      %p120 = scmp.eq.s32.totalorder %s22, 7
      %p121 = por %p119, %p120
      %p122 = scmp.ne.s32.totalorder %s114, %s117
      %p123 = scmp.eq.s32.totalorder %s22, 0
      %p124 = por %p122, %p123
      %p125 = scmp.ne.s32.totalorder %s114, %s117
      %p126 = scmp.eq.s32.totalorder %s27, 7
      %p127 = por %p125, %p126
      %p128 = scmp.ne.s32.totalorder %s117, %s118
      %p129 = scmp.eq.s32.totalorder %s27, 0
      %p130 = por %p128, %p129
      %p131 = scmp.ne.s32.totalorder %s117, %s118
      %p132 = scmp.eq.s32.totalorder %s28, 7
      %p133 = por %p131, %p132
      %p135 = scmp.ne.s32.totalorder %s118, %s134
      %p136 = scmp.eq.s32.totalorder %s28, 0
      %p137 = por %p135, %p136
      %s138 = ssub.s32 %s30, %s37
      %s139 = ssub.s32 %s29, %s41
      %s140 = sor.u32 %s138, %s139
      %p141 = scmp.eq.s32.totalorder %s140, 0
      %s143 = sadd.s32 %s142, 1
      %s144 = scalar_select %p141, %s142, %s143
      %p147 = pneg %p141
      %p148 = scmp.eq.s32.totalorder %s22, 7
      %p149 = por %p147, %p148
      %p150 = scmp.ne.s32.totalorder %s142, %s145
      %p151 = scmp.eq.s32.totalorder %s22, 0
      %p152 = por %p150, %p151
      %p153 = scmp.ne.s32.totalorder %s142, %s145
      %p154 = scmp.eq.s32.totalorder %s27, 7
      %p155 = por %p153, %p154
      %p156 = scmp.ne.s32.totalorder %s145, %s146
      %p157 = scmp.eq.s32.totalorder %s27, 0
      %p158 = por %p156, %p157
      %p159 = scmp.ne.s32.totalorder %s145, %s146
      %p160 = scmp.eq.s32.totalorder %s28, 7
      %p161 = por %p159, %p160
      %p163 = scmp.ne.s32.totalorder %s146, %s162
      %p164 = scmp.eq.s32.totalorder %s28, 0
      %p165 = por %p163, %p164
      %s166 = ssub.s32 %s29, %s41
      %p167 = scmp.eq.s32.totalorder %s166, 0
      %s169 = sadd.s32 %s168, 1
      %s170 = scalar_select %p167, %s168, %s169
      %p173 = pneg %p167
      %p174 = scmp.eq.s32.totalorder %s22, 7
      %p175 = por %p173, %p174
      %p176 = scmp.ne.s32.totalorder %s168, %s171
      %p177 = scmp.eq.s32.totalorder %s22, 0
      %p178 = por %p176, %p177
      %p179 = scmp.ne.s32.totalorder %s168, %s171
      %p180 = scmp.eq.s32.totalorder %s27, 7
      %p181 = por %p179, %p180
      %p182 = scmp.ne.s32.totalorder %s171, %s172
      %p183 = scmp.eq.s32.totalorder %s27, 0
      %p184 = por %p182, %p183
      %p185 = scmp.ne.s32.totalorder %s171, %s172
      %p186 = scmp.eq.s32.totalorder %s28, 7
      %p187 = por %p185, %p186
      %p189 = scmp.ne.s32.totalorder %s172, %s188
      %p190 = scmp.eq.s32.totalorder %s28, 0
      %p191 = por %p189, %p190
      %p192 = scmp.le.s32.totalorder 1, %s22
      %p193 = scmp.lt.s32.totalorder %s22, 9
      %p194 = pnand %p192, %p193
      %p195 = pneg %p194
      // Predicated region
      $region9: #{adplif_forward.1} parent=5 // pred_check
        _
      $region10: #{adplif_forward.1} parent=5 // pred_check_branch
        %197 = sbr.rel (%p194) target = $region12
      $region11: #{adplif_forward.1} parent=5 // pred_region
        %s198 = ssub.s32 %s22, 1
        // Predicated region
        $region13: #{adplif_forward.1} parent=11 // pred_check
          %p199 = pneg %p55
        $region14: #{adplif_forward.1} parent=11 // pred_check_branch
          %201 = sbr.rel (%p199) target = $region16
        $region15: #{adplif_forward.1} parent=11 // pred_region
          _
        $region16: #{adplif_forward.1} parent=11 // pred_fallthru
          _
        // Predicated region
        $region17: #{adplif_forward.1} parent=11 // pred_check
          %p202 = pneg %p76
        $region18: #{adplif_forward.1} parent=11 // pred_check_branch
          %204 = sbr.rel (%p202) target = $region20
        $region19: #{adplif_forward.1} parent=11 // pred_region
          _
        $region20: #{adplif_forward.1} parent=11 // pred_fallthru
          _
        // Predicated region
        $region21: #{adplif_forward.1} parent=11 // pred_check
          %p205 = pneg %p102
        $region22: #{adplif_forward.1} parent=11 // pred_check_branch
          %207 = sbr.rel (%p205) target = $region24
        $region23: #{adplif_forward.1} parent=11 // pred_region
          %s209 = ssub.s32 256, 256
          %210 = vsyncadd [#allocation6], %s209
          %s211 = smul.addr %s31, 2
          %s212 = smul.addr %s211, 128
          %s213 = scalar_lea.hbm %s2, %s212
          %s215 = sshll.u32 [#allocation5], 4
          %s216 = int_to_ptr.vmem [resolvable:$true] %s215
          %218 = dma.hbm_to_vmem [thread:$0]  %s213, 256, %s216, [#allocation6]
        $region24: #{adplif_forward.1} parent=11 // pred_fallthru
          _
      $region12: #{adplif_forward.1} parent=5 // pred_fallthru
        _
      %p219 = scmp.lt.s32.totalorder %s22, 8
      // Predicated region
      $region25: #{adplif_forward.1} parent=5 // pred_check
        %p220 = pneg %p219
      $region26: #{adplif_forward.1} parent=5 // pred_check_branch
        %222 = sbr.rel (%p220) target = $region28
      $region27: #{adplif_forward.1} parent=5 // pred_region
        // Predicated region
        $region29: #{adplif_forward.1} parent=27 // pred_check
          %p223 = pneg %p124
        $region30: #{adplif_forward.1} parent=27 // pred_check_branch
          %225 = sbr.rel (%p223) target = $region32
        $region31: #{adplif_forward.1} parent=27 // pred_region
          %s226 = sand.u32 %s114, 1
          %s227 = scalar_lea.sflag [#allocation9], %s226
          %s228 = sand.u32 %s114, 1
          %s229 = smul.addr %s228, 16
          %s230 = scalar_lea.vmem [#allocation8], %s229
          %s232 = ssub.s32 256, 256
          %233 = vsyncadd %s227, %s232
          %s234 = smul.addr %s29, 2
          %s235 = smul.addr %s30, 2
          %s236 = sadd.s32 %s234, %s235
          %s237 = smul.addr %s236, 128
          %s238 = scalar_lea.hbm %s3, %s237
          %s240 = sshll.u32 %s230, 4
          %s241 = int_to_ptr.vmem [resolvable:$true] %s240
          %243 = dma.hbm_to_vmem [thread:$0]  %s238, 256, %s241, %s227
        $region32: #{adplif_forward.1} parent=27 // pred_fallthru
          _
      $region28: #{adplif_forward.1} parent=5 // pred_fallthru
        _
      %p244 = scmp.le.s32.totalorder 1, %s22
      %p245 = scmp.lt.s32.totalorder %s22, 9
      %p246 = pnand %p244, %p245
      %p247 = pneg %p246
      // Predicated region
      $region33: #{adplif_forward.1} parent=5 // pred_check
        _
      $region34: #{adplif_forward.1} parent=5 // pred_check_branch
        %249 = sbr.rel (%p246) target = $region36
      $region35: #{adplif_forward.1} parent=5 // pred_region
        %s250 = ssub.s32 %s22, 1
        // Predicated region
        $region37: #{adplif_forward.1} parent=35 // pred_check
          %p251 = pneg %p102
        $region38: #{adplif_forward.1} parent=35 // pred_check_branch
          %253 = sbr.rel (%p251) target = $region40
        $region39: #{adplif_forward.1} parent=35 // pred_region
          %254 = dma.done [#allocation6], 256
        $region40: #{adplif_forward.1} parent=35 // pred_fallthru
          _
        %s255 = sand.u32 %s117, 1
        %s256 = scalar_lea.sflag [#allocation9], %s255
        %s257 = sand.u32 %s117, 1
        %s258 = smul.addr %s257, 16
        %s259 = scalar_lea.vmem [#allocation8], %s258
        // Predicated region
        $region41: #{adplif_forward.1} parent=35 // pred_check
          %p260 = pneg %p130
        $region42: #{adplif_forward.1} parent=35 // pred_check_branch
          %262 = sbr.rel (%p260) target = $region44
        $region43: #{adplif_forward.1} parent=35 // pred_region
          %263 = dma.done %s256, 256
        $region44: #{adplif_forward.1} parent=35 // pred_fallthru
          _
        %p264 = pneg %p55
        %p265 = pneg %p52
        %p266 = pneg %p76
        %p267 = pneg %p73
        %p268 = pneg %p102
        %p269 = pneg %p99
        %s270 = sand.u32 %s117, 1
        %s271 = scalar_lea.sflag [#allocation9], %s270
        %s272 = sand.u32 %s117, 1
        %s273 = smul.addr %s272, 16
        %s274 = scalar_lea.vmem [#allocation8], %s273
        %p275 = pneg %p130
        %p276 = pneg %p127
        %p277 = pneg %p158
        %p278 = pneg %p155
        %s279 = sand.u32 %s145, 1
        %s280 = scalar_lea.sflag [#allocation7], %s279
        %s281 = sand.u32 %s145, 1
        %s282 = smul.addr %s281, 16
        %s283 = scalar_lea.vmem [#allocation10], %s282
        %p284 = pneg %p184
        %p285 = pneg %p181
        %p286 = scmp.eq.s32.totalorder %s32, 0
        // Predicated region
        $region45: #{adplif_forward.1} parent=35 // pred_check
          %p287 = pneg %p286
        $region46: #{adplif_forward.1} parent=35 // pred_check_branch
          %289 = sbr.rel (%p287) target = $region48
        $region47: #{adplif_forward.1} parent=35 // pred_region
          %s290 = sld [smem:[#allocation3]]
          %s291 = sxor.u32 %s290, 2147483648
          %v292 = vstv %s291
          %v293 = vmul.f32 %v292, 1.442695
          %v294 = vpow.pop %v293
          %s295 = vtos %v294
          %s296 = sadd.f32 %s295, 1.0
          %v297 = vstv %s296
          %v298 = vrcp.pop %v297
          %s299 = vtos %v298
          %s300 = scalar_lea.smem [#allocation2], 0
          %301 = sst [smem:[%s300]] %s299
          %s302 = sld [smem:[#allocation4]]
          %s303 = sxor.u32 %s302, 2147483648
          %v304 = vstv %s303
          %v305 = vmul.f32 %v304, 1.442695
          %v306 = vpow.pop %v305
          %s307 = vtos %v306
          %s308 = sadd.f32 %s307, 1.0
          %v309 = vstv %s308
          %v310 = vrcp.pop %v309
          %s311 = vtos %v310
          %s312 = smul.f32 %s311, 0.5
          %s313 = sadd.f32 %s312, 0.75
          %s314 = scalar_lea.smem [#allocation2], 1
          %315 = sst [smem:[%s314]] %s313
          %v316 = vld [vmem:[#allocation5] sm:$0xff]
          %v317 = vld [vmem:[#allocation5 + $0x8] sm:$0xff]
          %318 = vst [vmem:[#allocation11] sm:$0xff] %v316
          %319 = vst [vmem:[#allocation11 + $0x8] sm:$0xff] %v317
        $region48: #{adplif_forward.1} parent=35 // pred_fallthru
          _
        %s320 = sld [smem:[#allocation2]]
        %s321 = sld [smem:[#allocation2 + $0x1]]
        %v322 = vld [vmem:[#allocation11] sm:$0xff]
        %v323 = vld [vmem:[#allocation11 + $0x8] sm:$0xff]
        %v324 = vld [vmem:[%s259] sm:$0xff]
        %v325 = vld [vmem:[%s259 + $0x8] sm:$0xff]
        %v326 = vadd.f32 %v322, %v324
        %v327 = vadd.f32 %v323, %v325
        %v328 = vstv %s321
        %vm329 = vcmp.gt.f32.partialorder %v326, %v328
        %vm330 = vcmp.gt.f32.partialorder %v327, %v328
        %v331 = vsel %vm329, 1, 0
        %v332 = vsel %vm330, 1, 0
        %v333 = vcvt.s32.f32 %v331
        %v334 = vcvt.s32.f32 %v332
        %335 = vst [vmem:[%s283] sm:$0xff] %v333
        %336 = vst [vmem:[%s283 + $0x8] sm:$0xff] %v334
        %v337 = vstv %s320
        %v338 = vmul.f32 %v337, %v326
        %v339 = vmul.f32 %v337, %v327
        %v340 = vsel %vm329, 0.0, %v338
        %v341 = vsel %vm330, 0.0, %v339
        %342 = vst [vmem:[#allocation11] sm:$0xff] %v340
        %343 = vst [vmem:[#allocation11 + $0x8] sm:$0xff] %v341
        %s344 = sand.u32 %s145, 1
        %s345 = scalar_lea.sflag [#allocation7], %s344
        %s346 = sand.u32 %s145, 1
        %s347 = smul.addr %s346, 16
        %s348 = scalar_lea.vmem [#allocation10], %s347
        // Predicated region
        $region49: #{adplif_forward.1} parent=35 // pred_check
          %p349 = pneg %p155
        $region50: #{adplif_forward.1} parent=35 // pred_check_branch
          %351 = sbr.rel (%p349) target = $region52
        $region51: #{adplif_forward.1} parent=35 // pred_region
          %s353 = ssub.s32 256, 256
          %354 = vsyncadd %s345, %s353
          %s355 = smul.addr %s31, 2
          %s356 = smul.addr %s32, 2
          %s357 = sadd.s32 %s355, %s356
          %s358 = smul.addr %s357, 128
          %s359 = scalar_lea.hbm %s4, %s358
          %s361 = sshll.u32 %s348, 4
          %s362 = int_to_ptr.vmem [resolvable:$true] %s361
          %364 = dma.vmem_to_hbm [thread:$0]  %s362, 256, %s359, %s345
        $region52: #{adplif_forward.1} parent=35 // pred_fallthru
          _
        // Predicated region
        $region53: #{adplif_forward.1} parent=35 // pred_check
          %p365 = pneg %p181
        $region54: #{adplif_forward.1} parent=35 // pred_check_branch
          %367 = sbr.rel (%p365) target = $region56
        $region55: #{adplif_forward.1} parent=35 // pred_region
          %s369 = ssub.s32 256, 256
          %370 = vsyncadd [#allocation12], %s369
          %s371 = smul.addr %s31, 2
          %s372 = smul.addr %s371, 128
          %s373 = scalar_lea.hbm %s5, %s372
          %s375 = sshll.u32 [#allocation11], 4
          %s376 = int_to_ptr.vmem [resolvable:$true] %s375
          %378 = dma.vmem_to_hbm [thread:$0]  %s376, 256, %s373, [#allocation12]
        $region56: #{adplif_forward.1} parent=35 // pred_fallthru
          _
        // Predicated region
        $region57: #{adplif_forward.1} parent=35 // pred_check
          %p379 = pneg %p181
        $region58: #{adplif_forward.1} parent=35 // pred_check_branch
          %381 = sbr.rel (%p379) target = $region60
        $region59: #{adplif_forward.1} parent=35 // pred_region
          %382 = dma.done [#allocation12], 256
        $region60: #{adplif_forward.1} parent=35 // pred_fallthru
          _
      $region36: #{adplif_forward.1} parent=5 // pred_fallthru
        _
      %p383 = scmp.le.s32.totalorder 2, %s22
      // Predicated region
      $region61: #{adplif_forward.1} parent=5 // pred_check
        %p384 = pneg %p383
      $region62: #{adplif_forward.1} parent=5 // pred_check_branch
        %386 = sbr.rel (%p384) target = $region64
      $region63: #{adplif_forward.1} parent=5 // pred_region
        %s387 = ssub.s32 %s22, 2
        // Predicated region
        $region65: #{adplif_forward.1} parent=63 // pred_check
          %p388 = pneg %p161
        $region66: #{adplif_forward.1} parent=63 // pred_check_branch
          %390 = sbr.rel (%p388) target = $region68
        $region67: #{adplif_forward.1} parent=63 // pred_region
          %s391 = sand.u32 %s146, 1
          %s392 = scalar_lea.sflag [#allocation7], %s391
          %s393 = sand.u32 %s146, 1
          %s394 = smul.addr %s393, 16
          %s395 = scalar_lea.vmem [#allocation10], %s394
          %396 = dma.done %s392, 256
        $region68: #{adplif_forward.1} parent=63 // pred_fallthru
          _
      $region64: #{adplif_forward.1} parent=5 // pred_fallthru
        _
    $region6: #{adplif_forward.1} parent=1 // loop_footer
      %s26 = sadd.s32 1, %s22
    $region7: #{adplif_forward.1} parent=1 // loop_footer_branch
      %21 = sbr.rel target = $region3
    $region8: #{adplif_forward.1} parent=1 // loop_exit
      _
    %397 = vsyncpa [#allocation6], 1
    %s398 = scalar_lea.sflag [#allocation6], 1
    %399 = vsyncpa %s398, 1
    %400 = vsyncpa [#allocation9], 1
    %s401 = scalar_lea.sflag [#allocation9], 1
    %402 = vsyncpa %s401, 1
    %403 = vsyncpa [#allocation7], 1
    %s404 = scalar_lea.sflag [#allocation7], 1
    %405 = vsyncpa %s404, 1
    %406 = vsyncpa [#allocation12], 1

</llo_original>
